<compile_context>
chip_gen: v6e
topology: v6e:2x2x1
jax: 0.10.0
libtpu: 0.0.40
codegen_flags: <defaults>
</compile_context>

<pallas_src>
import jax
import jax.numpy as jnp
from jax.experimental import pallas as pl
from jax.experimental.pallas import tpu as pltpu

EPSILON = 1e-7


def _lane_block_sum(x):
    """Sum a (C, W) value over 128-lane blocks -> (C, 128).

    W must be 128 * 2**k.  Every slice start is a multiple of 128, so each level is
    pure lane-aligned VPU vreg adds (no relayout, no cross-lane work).
    """
    w = x.shape[1]
    while w > 128:
        half = w // 2
        x = x[:, :half] + x[:, half:]
        w = half
    return x


def _f1_loss_kernel(n_ref, y_pred_ref, y_true_ref, out_ref, acc_tp, acc_p, acc_cnt):
    # n_ref     : (1,) int32 in SMEM (scalar-prefetched true batch size)
    # y_pred_ref: (C, TN) float in VMEM (classes on sublanes, batch on lanes)
    # y_true_ref: (1, TN) int32 in VMEM
    # out_ref   : (1, 1) float32 in SMEM (scalar loss, written on last step)
    # acc_*     : (C, 128) float32 VMEM scratch accumulators
    i = pl.program_id(0)
    c, tn = y_pred_ref.shape
    n = n_ref[0]

    @pl.when(i == 0)
    def _init():
        acc_tp[...] = jnp.zeros_like(acc_tp)
        acc_p[...] = jnp.zeros_like(acc_p)
        acc_cnt[...] = jnp.zeros_like(acc_cnt)

    logits = y_pred_ref[...].astype(jnp.float32)            # (C, TN)
    labels = y_true_ref[...]                                 # (1, TN) int32

    # Numerically-stable softmax over the class axis (axis 0 -> per-lane VPU/XLU work).
    m = jnp.max(logits, axis=0, keepdims=True)               # (1, TN)
    e = jnp.exp(logits - m)                                   # (C, TN)
    denom = jnp.sum(e, axis=0, keepdims=True)                 # (1, TN)
    inv = pl.reciprocal(denom, approx=True)                   # EUP slot (cheap)
    inv = inv * (2.0 - denom * inv)                           # one Newton step -> ~f32 accuracy
    p = e * inv                                               # (C, TN)

    class_ids = jax.lax.broadcasted_iota(jnp.int32, (c, tn), 0)

    def accumulate(apply_mask):
        lbl = labels
        p_sum = p
        if apply_mask:
            # Columns >= n hold unspecified data (uneven final block / small-batch pad):
            # kill their one-hot match and their softmax mass.
            col = jax.lax.broadcasted_iota(jnp.int32, (1, tn), 1) + i * tn
            valid = col < n                                    # (1, TN) bool
            lbl = jnp.where(valid, labels, -1)
            p_sum = jnp.where(valid, p, 0.0)
        match = class_ids == lbl                               # (C, TN) bool
        tp_c = jnp.where(match, p, 0.0)                        # onehot * p (select, no converts)
        cnt_c = jnp.where(match, jnp.float32(1.0), jnp.float32(0.0))
        # Lane-block tree reduction -> single small RMW per accumulator per step.
        acc_tp[...] += _lane_block_sum(tp_c)
        acc_p[...] += _lane_block_sum(p_sum)
        acc_cnt[...] += _lane_block_sum(cnt_c)

    # Only tiles that reach past the true batch size pay for the tail mask.
    is_partial = (i + 1) * tn > n

    @pl.when(jnp.logical_not(is_partial))
    def _full_tile():
        accumulate(False)

    @pl.when(is_partial)
    def _tail_tile():
        accumulate(True)

    @pl.when(i == pl.num_programs(0) - 1)
    def _finalize():
        # Single cross-lane reduction per accumulator (128 lanes -> per-class scalars).
        tp = jnp.sum(acc_tp[...], axis=1, keepdims=True)       # (C, 1)
        colsum = jnp.sum(acc_p[...], axis=1, keepdims=True)    # (C, 1)
        cnt = jnp.sum(acc_cnt[...], axis=1, keepdims=True)     # (C, 1)

        fp = colsum - tp      # == sum((1 - onehot) * p)
        fn = cnt - tp         # == sum(onehot * (1 - p))
        precision = tp / (tp + fp + EPSILON)
        recall = tp / (tp + fn + EPSILON)
        f1 = 2.0 * (precision * recall) / (precision + recall + EPSILON)
        f1 = jnp.clip(f1, EPSILON, 1.0 - EPSILON)
        out_ref[0, 0] = 1.0 - jnp.mean(f1)


def _cdiv(a, b):
    return -(-a // b)


def _prev_pow2(x):
    return 1 << (x.bit_length() - 1)


def f1_loss(y_pred, y_true, classes=3, tile_n=65536):
    assert y_pred.ndim == 2
    assert y_true.ndim == 1
    assert y_pred.shape[1] == classes
    n = y_pred.shape[0]
    assert n >= 1

    # Lane-dense layout: classes on sublanes, batch on lanes.  (Kept in the wrapper on
    # purpose — see header comment — but the padding copy of the old version is gone.)
    y_pred_t = jnp.transpose(y_pred)                       # (C, N), keep caller's dtype
    labels = y_true.astype(jnp.int32).reshape(1, n)        # (1, N)
    n_arr = jnp.array([n], dtype=jnp.int32)                # true batch size (SMEM prefetch)

    if n < 128:
        # Tiny batch: pad to one 128-lane tile (negligible copy); masked in-kernel.
        y_pred_t = jnp.pad(y_pred_t, ((0, 0), (0, 128 - n)))
        labels = jnp.pad(labels, ((0, 0), (0, 128 - n)), constant_values=-1)
        tn = 128
    else:
        # tn = 128 * (power of two) and tn <= n, so blocks never exceed the array and
        # the in-kernel lane-block tree reduction stays power-of-two.
        cap_blocks = _prev_pow2(max(1, tile_n // 128))
        tn = 128 * min(cap_blocks, _prev_pow2(n // 128))
    grid = (_cdiv(max(n, 128), tn),)

    out = pl.pallas_call(
        _f1_loss_kernel,
        out_shape=jax.ShapeDtypeStruct((1, 1), jnp.float32),
        grid_spec=pltpu.PrefetchScalarGridSpec(
            num_scalar_prefetch=1,
            grid=grid,
            in_specs=[
                pl.BlockSpec((classes, tn), lambda i, n_ref: (0, i)),
                pl.BlockSpec((1, tn), lambda i, n_ref: (0, i)),
            ],
            out_specs=pl.BlockSpec(
                (1, 1), lambda i, n_ref: (0, 0),
                memory_space=pltpu.MemorySpace.SMEM,
            ),
            scratch_shapes=[
                pltpu.VMEM((classes, 128), jnp.float32),   # Σ onehot * p
                pltpu.VMEM((classes, 128), jnp.float32),   # Σ p (valid columns only)
                pltpu.VMEM((classes, 128), jnp.float32),   # Σ onehot
            ],
        ),
        compiler_params=pltpu.CompilerParams(
            dimension_semantics=("arbitrary",),            # sequential accumulation
        ),
    )(n_arr, y_pred_t, labels)
    return out[0, 0]


def _f1_loss_ref(y_pred, y_true, classes=3):
    # Pure-JAX reference mirroring the PyTorch module exactly.
    y_onehot = jax.nn.one_hot(y_true, classes, dtype=jnp.float32)
    p = jax.nn.softmax(y_pred.astype(jnp.float32), axis=1)
    tp = jnp.sum(y_onehot * p, axis=0)
    fp = jnp.sum((1.0 - y_onehot) * p, axis=0)
    fn = jnp.sum(y_onehot * (1.0 - p), axis=0)
    precision = tp / (tp + fp + EPSILON)
    recall = tp / (tp + fn + EPSILON)
    f1 = 2.0 * (precision * recall) / (precision + recall + EPSILON)
    f1 = jnp.clip(f1, EPSILON, 1.0 - EPSILON)
    return 1.0 - jnp.mean(f1)


if __name__ == "__main__":
    classes = 3
    key = jax.random.PRNGKey(0)
    k1, k2, k3, k4 = jax.random.split(key, 4)

    # Case 1: tiny batch (n < 128 -> single padded 128-lane tile, masked tail).
    n1 = 8
    y_pred1 = jax.random.normal(k1, (n1, classes), dtype=jnp.float32)
    y_true1 = jax.random.randint(k2, (n1,), 0, classes, dtype=jnp.int32)
    loss1 = f1_loss(y_pred1, y_true1, classes=classes)
    jax.block_until_ready(loss1)
    ref1 = _f1_loss_ref(y_pred1, y_true1, classes=classes)
    assert jnp.allclose(loss1, ref1, atol=1e-5, rtol=1e-5), (loss1, ref1)

    # Case 2: multi-step grid with an uneven final block (n=300 -> tn=256, grid=2),
    # exercising the un-padded ragged-tail path and the steady-state unmasked path.
    n2 = 300
    y_pred2 = jax.random.normal(k3, (n2, classes), dtype=jnp.float32)
    y_true2 = jax.random.randint(k4, (n2,), 0, classes, dtype=jnp.int32)
    loss2 = f1_loss(y_pred2, y_true2, classes=classes)
    jax.block_until_ready(loss2)
    ref2 = _f1_loss_ref(y_pred2, y_true2, classes=classes)
    assert jnp.allclose(loss2, ref2, atol=1e-5, rtol=1e-5), (loss2, ref2)

    print("KERNEL_OK")
</pallas_src>

<mosaic_0001>
module attributes {stable_mosaic.version = 11 : i64} {
  func.func @_f1_loss_kernel(%arg0: i32, %arg1: memref<1xi32, #tpu.memory_space<smem>>, %arg2: memref<3x128xf32, #tpu.memory_space<vmem>>, %arg3: memref<1x128xi32, #tpu.memory_space<vmem>>, %arg4: memref<1x1xf32, #tpu.memory_space<smem>>, %arg5: memref<3x128xf32, #tpu.memory_space<vmem>>, %arg6: memref<3x128xf32, #tpu.memory_space<vmem>>, %arg7: memref<3x128xf32, #tpu.memory_space<vmem>>) attributes {dimension_semantics = [#tpu.dimension_semantics<arbitrary>], iteration_bounds = array<i64: 1>, scalar_prefetch = 1 : i64, scratch_operands = 3 : i64, tpu.core_type = #tpu.core_type<tc>, window_params = [{transform_indices = @transform_0, window_bounds = array<i64: 3, 128>}, {transform_indices = @transform_1, window_bounds = array<i64: 1, 128>}, {transform_indices = @transform_2, window_bounds = array<i64: 1, 1>}]} {
    %c0 = arith.constant 0 : index
    %0 = memref.load %arg1[%c0] : memref<1xi32, #tpu.memory_space<smem>>
    %c0_i32 = arith.constant 0 : i32
    %1 = arith.cmpi eq, %arg0, %c0_i32 : i32
    %2 = arith.extui %1 : i1 to i32
    %c0_i32_0 = arith.constant 0 : i32
    %3 = arith.cmpi ne, %2, %c0_i32_0 : i32
    scf.if %3 {
      %cst_11 = arith.constant 0.000000e+00 : f32
      %32 = vector.broadcast %cst_11 : f32 to vector<3x128xf32>
      %c0_12 = arith.constant 0 : index
      %c0_13 = arith.constant 0 : index
      %33 = vector.load %arg5[%c0_12, %c0_13] : memref<3x128xf32, #tpu.memory_space<vmem>>, vector<3x128xf32>
      tpu.vector_store %arg5[%c0_12, %c0_13], %32 {strides = array<i32>} : memref<3x128xf32, #tpu.memory_space<vmem>>, vector<3x128xf32>,
      %cst_14 = arith.constant 0.000000e+00 : f32
      %34 = vector.broadcast %cst_14 : f32 to vector<3x128xf32>
      %c0_15 = arith.constant 0 : index
      %c0_16 = arith.constant 0 : index
      %35 = vector.load %arg6[%c0_15, %c0_16] : memref<3x128xf32, #tpu.memory_space<vmem>>, vector<3x128xf32>
      tpu.vector_store %arg6[%c0_15, %c0_16], %34 {strides = array<i32>} : memref<3x128xf32, #tpu.memory_space<vmem>>, vector<3x128xf32>,
      %cst_17 = arith.constant 0.000000e+00 : f32
      %36 = vector.broadcast %cst_17 : f32 to vector<3x128xf32>
      %c0_18 = arith.constant 0 : index
      %c0_19 = arith.constant 0 : index
      %37 = vector.load %arg7[%c0_18, %c0_19] : memref<3x128xf32, #tpu.memory_space<vmem>>, vector<3x128xf32>
      tpu.vector_store %arg7[%c0_18, %c0_19], %36 {strides = array<i32>} : memref<3x128xf32, #tpu.memory_space<vmem>>, vector<3x128xf32>,
    } else {
    }
    %c0_1 = arith.constant 0 : index
    %c0_2 = arith.constant 0 : index
    %4 = vector.load %arg2[%c0_1, %c0_2] : memref<3x128xf32, #tpu.memory_space<vmem>>, vector<3x128xf32>
    %c0_3 = arith.constant 0 : index
    %c0_4 = arith.constant 0 : index
    %5 = vector.load %arg3[%c0_3, %c0_4] : memref<1x128xi32, #tpu.memory_space<vmem>>, vector<1x128xi32>
    %cst = arith.constant dense<0xFF800000> : vector<128xf32>
    %6 = vector.multi_reduction <maximumf>, %4, %cst [0] : vector<3x128xf32> to vector<128xf32>
    %7 = vector.shape_cast %6 : vector<128xf32> to vector<1x128xf32>
    %8 = vector.broadcast %7 : vector<1x128xf32> to vector<3x128xf32>
    %9 = arith.subf %4, %8 : vector<3x128xf32>
    %10 = math.exp %9 : vector<3x128xf32>
    %cst_5 = arith.constant dense<0.000000e+00> : vector<128xf32>
    %11 = vector.multi_reduction <add>, %10, %cst_5 [0] : vector<3x128xf32> to vector<128xf32>
    %12 = vector.shape_cast %11 : vector<128xf32> to vector<1x128xf32>
    %13 = tpu.reciprocal %12 {approx = true} : vector<1x128xf32> -> vector<1x128xf32>
    %14 = arith.mulf %12, %13 : vector<1x128xf32>
    %cst_6 = arith.constant 2.000000e+00 : f32
    %15 = vector.broadcast %cst_6 : f32 to vector<1x128xf32>
    %16 = arith.subf %15, %14 : vector<1x128xf32>
    %17 = arith.mulf %13, %16 : vector<1x128xf32>
    %18 = vector.broadcast %17 : vector<1x128xf32> to vector<3x128xf32>
    %19 = arith.mulf %10, %18 : vector<3x128xf32>
    %20 = tpu.iota {dimensions = array<i32: 0>} : vector<3x128xi32>
    %c1_i32 = arith.constant 1 : i32
    %21 = arith.addi %arg0, %c1_i32 : i32
    %c128_i32 = arith.constant 128 : i32
    %22 = arith.muli %21, %c128_i32 : i32
    %23 = arith.cmpi sgt, %22, %0 : i32
    %true = arith.constant true
    %24 = arith.xori %23, %true : i1
    %25 = arith.extui %24 : i1 to i32
    %c0_i32_7 = arith.constant 0 : i32
    %26 = arith.cmpi ne, %25, %c0_i32_7 : i32
    scf.if %26 {
      %32 = vector.broadcast %5 : vector<1x128xi32> to vector<3x128xi32>
      %33 = arith.cmpi eq, %20, %32 : vector<3x128xi32>
      %cst_11 = arith.constant 0.000000e+00 : f32
      %34 = vector.broadcast %cst_11 : f32 to vector<3x128xf32>
      %35 = arith.select %33, %19, %34 : vector<3x128xi1>, vector<3x128xf32>
      %cst_12 = arith.constant 1.000000e+00 : f32
      %cst_13 = arith.constant 0.000000e+00 : f32
      %36 = vector.broadcast %cst_12 : f32 to vector<3x128xf32>
      %37 = vector.broadcast %cst_13 : f32 to vector<3x128xf32>
      %38 = arith.select %33, %36, %37 : vector<3x128xi1>, vector<3x128xf32>
      %c0_14 = arith.constant 0 : index
      %c0_15 = arith.constant 0 : index
      %39 = vector.load %arg5[%c0_14, %c0_15] : memref<3x128xf32, #tpu.memory_space<vmem>>, vector<3x128xf32>
      %40 = arith.addf %39, %35 : vector<3x128xf32>
      %c0_16 = arith.constant 0 : index
      %c0_17 = arith.constant 0 : index
      %41 = vector.load %arg5[%c0_16, %c0_17] : memref<3x128xf32, #tpu.memory_space<vmem>>, vector<3x128xf32>
      tpu.vector_store %arg5[%c0_16, %c0_17], %40 {strides = array<i32>} : memref<3x128xf32, #tpu.memory_space<vmem>>, vector<3x128xf32>,
      %c0_18 = arith.constant 0 : index
      %c0_19 = arith.constant 0 : index
      %42 = vector.load %arg6[%c0_18, %c0_19] : memref<3x128xf32, #tpu.memory_space<vmem>>, vector<3x128xf32>
      %43 = arith.addf %42, %19 : vector<3x128xf32>
      %c0_20 = arith.constant 0 : index
      %c0_21 = arith.constant 0 : index
      %44 = vector.load %arg6[%c0_20, %c0_21] : memref<3x128xf32, #tpu.memory_space<vmem>>, vector<3x128xf32>
      tpu.vector_store %arg6[%c0_20, %c0_21], %43 {strides = array<i32>} : memref<3x128xf32, #tpu.memory_space<vmem>>, vector<3x128xf32>,
      %c0_22 = arith.constant 0 : index
      %c0_23 = arith.constant 0 : index
      %45 = vector.load %arg7[%c0_22, %c0_23] : memref<3x128xf32, #tpu.memory_space<vmem>>, vector<3x128xf32>
      %46 = arith.addf %45, %38 : vector<3x128xf32>
      %c0_24 = arith.constant 0 : index
      %c0_25 = arith.constant 0 : index
      %47 = vector.load %arg7[%c0_24, %c0_25] : memref<3x128xf32, #tpu.memory_space<vmem>>, vector<3x128xf32>
      tpu.vector_store %arg7[%c0_24, %c0_25], %46 {strides = array<i32>} : memref<3x128xf32, #tpu.memory_space<vmem>>, vector<3x128xf32>,
    } else {
    }
    %27 = arith.extui %23 : i1 to i32
    %c0_i32_8 = arith.constant 0 : i32
    %28 = arith.cmpi ne, %27, %c0_i32_8 : i32
    scf.if %28 {
      %32 = tpu.iota {dimensions = array<i32: 1>} : vector<1x128xi32>
      %c128_i32_11 = arith.constant 128 : i32
      %33 = arith.muli %arg0, %c128_i32_11 : i32
      %34 = vector.broadcast %33 : i32 to vector<1x128xi32>
      %35 = arith.addi %32, %34 : vector<1x128xi32>
      %36 = vector.broadcast %0 : i32 to vector<1x128xi32>
      %37 = arith.cmpi slt, %35, %36 : vector<1x128xi32>
      %c-1_i32 = arith.constant -1 : i32
      %38 = vector.broadcast %c-1_i32 : i32 to vector<1x128xi32>
      %39 = arith.select %37, %5, %38 : vector<1x128xi1>, vector<1x128xi32>
      %cst_12 = arith.constant 0.000000e+00 : f32
      %40 = vector.shape_cast %37 : vector<1x128xi1> to vector<1x128xi1>
      %41 = vector.broadcast %40 : vector<1x128xi1> to vector<3x128xi1>
      %42 = vector.broadcast %cst_12 : f32 to vector<3x128xf32>
      %43 = arith.select %41, %19, %42 : vector<3x128xi1>, vector<3x128xf32>
      %44 = vector.broadcast %39 : vector<1x128xi32> to vector<3x128xi32>
      %45 = arith.cmpi eq, %20, %44 : vector<3x128xi32>
      %cst_13 = arith.constant 0.000000e+00 : f32
      %46 = vector.broadcast %cst_13 : f32 to vector<3x128xf32>
      %47 = arith.select %45, %19, %46 : vector<3x128xi1>, vector<3x128xf32>
      %cst_14 = arith.constant 1.000000e+00 : f32
      %cst_15 = arith.constant 0.000000e+00 : f32
      %48 = vector.broadcast %cst_14 : f32 to vector<3x128xf32>
      %49 = vector.broadcast %cst_15 : f32 to vector<3x128xf32>
      %50 = arith.select %45, %48, %49 : vector<3x128xi1>, vector<3x128xf32>
      %c0_16 = arith.constant 0 : index
      %c0_17 = arith.constant 0 : index
      %51 = vector.load %arg5[%c0_16, %c0_17] : memref<3x128xf32, #tpu.memory_space<vmem>>, vector<3x128xf32>
      %52 = arith.addf %51, %47 : vector<3x128xf32>
      %c0_18 = arith.constant 0 : index
      %c0_19 = arith.constant 0 : index
      %53 = vector.load %arg5[%c0_18, %c0_19] : memref<3x128xf32, #tpu.memory_space<vmem>>, vector<3x128xf32>
      tpu.vector_store %arg5[%c0_18, %c0_19], %52 {strides = array<i32>} : memref<3x128xf32, #tpu.memory_space<vmem>>, vector<3x128xf32>,
      %c0_20 = arith.constant 0 : index
      %c0_21 = arith.constant 0 : index
      %54 = vector.load %arg6[%c0_20, %c0_21] : memref<3x128xf32, #tpu.memory_space<vmem>>, vector<3x128xf32>
      %55 = arith.addf %54, %43 : vector<3x128xf32>
      %c0_22 = arith.constant 0 : index
      %c0_23 = arith.constant 0 : index
      %56 = vector.load %arg6[%c0_22, %c0_23] : memref<3x128xf32, #tpu.memory_space<vmem>>, vector<3x128xf32>
      tpu.vector_store %arg6[%c0_22, %c0_23], %55 {strides = array<i32>} : memref<3x128xf32, #tpu.memory_space<vmem>>, vector<3x128xf32>,
      %c0_24 = arith.constant 0 : index
      %c0_25 = arith.constant 0 : index
      %57 = vector.load %arg7[%c0_24, %c0_25] : memref<3x128xf32, #tpu.memory_space<vmem>>, vector<3x128xf32>
      %58 = arith.addf %57, %50 : vector<3x128xf32>
      %c0_26 = arith.constant 0 : index
      %c0_27 = arith.constant 0 : index
      %59 = vector.load %arg7[%c0_26, %c0_27] : memref<3x128xf32, #tpu.memory_space<vmem>>, vector<3x128xf32>
      tpu.vector_store %arg7[%c0_26, %c0_27], %58 {strides = array<i32>} : memref<3x128xf32, #tpu.memory_space<vmem>>, vector<3x128xf32>,
    } else {
    }
    %c0_i32_9 = arith.constant 0 : i32
    %29 = arith.cmpi eq, %arg0, %c0_i32_9 : i32
    %30 = arith.extui %29 : i1 to i32
    %c0_i32_10 = arith.constant 0 : i32
    %31 = arith.cmpi ne, %30, %c0_i32_10 : i32
    scf.if %31 {
      %c0_11 = arith.constant 0 : index
      %c0_12 = arith.constant 0 : index
      %32 = vector.load %arg5[%c0_11, %c0_12] : memref<3x128xf32, #tpu.memory_space<vmem>>, vector<3x128xf32>
      %cst_13 = arith.constant dense<0.000000e+00> : vector<3xf32>
      %33 = vector.multi_reduction <add>, %32, %cst_13 [1] : vector<3x128xf32> to vector<3xf32>
      %34 = vector.shape_cast %33 : vector<3xf32> to vector<3x1xf32>
      %c0_14 = arith.constant 0 : index
      %c0_15 = arith.constant 0 : index
      %35 = vector.load %arg6[%c0_14, %c0_15] : memref<3x128xf32, #tpu.memory_space<vmem>>, vector<3x128xf32>
      %cst_16 = arith.constant dense<0.000000e+00> : vector<3xf32>
      %36 = vector.multi_reduction <add>, %35, %cst_16 [1] : vector<3x128xf32> to vector<3xf32>
      %37 = vector.shape_cast %36 : vector<3xf32> to vector<3x1xf32>
      %c0_17 = arith.constant 0 : index
      %c0_18 = arith.constant 0 : index
      %38 = vector.load %arg7[%c0_17, %c0_18] : memref<3x128xf32, #tpu.memory_space<vmem>>, vector<3x128xf32>
      %cst_19 = arith.constant dense<0.000000e+00> : vector<3xf32>
      %39 = vector.multi_reduction <add>, %38, %cst_19 [1] : vector<3x128xf32> to vector<3xf32>
      %40 = vector.shape_cast %39 : vector<3xf32> to vector<3x1xf32>
      %41 = arith.subf %37, %34 : vector<3x1xf32>
      %42 = arith.subf %40, %34 : vector<3x1xf32>
      %43 = arith.addf %34, %41 : vector<3x1xf32>
      %cst_20 = arith.constant 1.000000e-07 : f32
      %44 = vector.broadcast %cst_20 : f32 to vector<3x1xf32>
      %45 = arith.addf %43, %44 : vector<3x1xf32>
      %46 = arith.divf %34, %45 : vector<3x1xf32>
      %47 = arith.addf %34, %42 : vector<3x1xf32>
      %cst_21 = arith.constant 1.000000e-07 : f32
      %48 = vector.broadcast %cst_21 : f32 to vector<3x1xf32>
      %49 = arith.addf %47, %48 : vector<3x1xf32>
      %50 = arith.divf %34, %49 : vector<3x1xf32>
      %51 = arith.mulf %46, %50 : vector<3x1xf32>
      %cst_22 = arith.constant 2.000000e+00 : f32
      %52 = vector.broadcast %cst_22 : f32 to vector<3x1xf32>
      %53 = arith.mulf %52, %51 : vector<3x1xf32>
      %54 = arith.addf %46, %50 : vector<3x1xf32>
      %cst_23 = arith.constant 1.000000e-07 : f32
      %55 = vector.broadcast %cst_23 : f32 to vector<3x1xf32>
      %56 = arith.addf %54, %55 : vector<3x1xf32>
      %57 = arith.divf %53, %56 : vector<3x1xf32>
      %cst_24 = arith.constant 1.000000e-07 : f32
      %cst_25 = arith.constant 0.99999988 : f32
      %58 = vector.broadcast %cst_24 : f32 to vector<3x1xf32>
      %59 = arith.maximumf %58, %57 : vector<3x1xf32>
      %60 = vector.broadcast %cst_25 : f32 to vector<3x1xf32>
      %61 = arith.minimumf %60, %59 : vector<3x1xf32>
      %62 = vector.shape_cast %61 : vector<3x1xf32> to vector<1x3x1xf32>
      %cst_26 = arith.constant dense<0.000000e+00> : vector<1xf32>
      %63 = vector.multi_reduction <add>, %62, %cst_26 [1, 2] : vector<1x3x1xf32> to vector<1xf32>
      %64 = vector.shape_cast %63 : vector<1xf32> to vector<1x1x1xf32>
      %65 = vector.extract %64[0, 0, 0] : f32 from vector<1x1x1xf32>
      %cst_27 = arith.constant 3.000000e+00 : f32
      %66 = arith.divf %65, %cst_27 : f32
      %cst_28 = arith.constant 1.000000e+00 : f32
      %67 = arith.subf %cst_28, %66 : f32
      %c0_29 = arith.constant 0 : index
      %c0_30 = arith.constant 0 : index
      %68 = memref.load %arg4[%c0_29, %c0_30] : memref<1x1xf32, #tpu.memory_space<smem>>
      memref.store %67, %arg4[%c0_29, %c0_30] : memref<1x1xf32, #tpu.memory_space<smem>>
    } else {
    }
    return
  }
  func.func @transform_0(%arg0: i32, %arg1: memref<1xi32, #tpu.memory_space<smem>>) -> (i32, i32) {
    %c0_i32 = arith.constant 0 : i32
    %c0_i32_0 = arith.constant 0 : i32
    return %c0_i32, %arg0 : i32, i32
  }
  func.func @transform_1(%arg0: i32, %arg1: memref<1xi32, #tpu.memory_space<smem>>) -> (i32, i32) {
    %c0_i32 = arith.constant 0 : i32
    %c0_i32_0 = arith.constant 0 : i32
    return %c0_i32, %arg0 : i32, i32
  }
  func.func @transform_2(%arg0: i32, %arg1: memref<1xi32, #tpu.memory_space<smem>>) -> (i32, i32) {
    %c0_i32 = arith.constant 0 : i32
    %c0_i32_0 = arith.constant 0 : i32
    %c0_i32_1 = arith.constant 0 : i32
    return %c0_i32, %c0_i32_0 : i32, i32
  }
}

</mosaic_0001>

<llo_original>
// kernel: tpu_custom_call.1
$region0: #{tpu_custom_call.1}
  #allocation0 [shape = 'u32[]', space=smem, size = 0x4, offset = 0x4, fixed_abs, tag = 'smem constant byte address 0x4 - core index']
  #allocation1 [shape = 'u32[144,128]{1,0:T(1,128)}', space=vmem, size = 0x12000, scoped, tag = 'internal scratch']
  #allocation2 [shape = 'f32[3,128]{1,0:T(4,128)}', space=vmem, size = 0x800, scoped, tag = 'scratch operand']
  #allocation3 [shape = 'f32[3,128]{1,0:T(4,128)}', space=vmem, size = 0x800, scoped, tag = 'scratch operand']
  #allocation4 [shape = 'f32[3,128]{1,0:T(4,128)}', space=vmem, size = 0x800, scoped, tag = 'scratch operand']
  #allocation5 [shape = 's32[1]{0}', space=sflag, size = 0x4, scoped, tag = 'scoped memory for tpu_custom_call.1']
  #allocation6 [shape = 's32[1]{0:T(128)S(6)}', space=smem, size = 0x200, scoped, tag = 'prefetched SMEM operand 0']
  %s0 = inlined_call_operand.<no memory space> [shape: s32[1], index: 0, kind: input, shape index: {}]
  %s1 = inlined_call_operand.hbm [shape: f32[3,128], index: 1, kind: input, shape index: {}]
  %s2 = inlined_call_operand.vmem [shape: s32[1,128], index: 2, kind: input, shape index: {}]
  %s3 = inlined_call_operand.hbm [shape: f32[1,1], index: 3, kind: output, shape index: {}]
  %s4 = sld [smem:[#allocation0]]
  $region38: #{tpu_custom_call.1} parent=0
    _
  %s6 = ssub.s32 1, %s4
  %s7 = scalar_select 0, %s6, %s4
  %8 = sst [smem:[#allocation6]] %s0
  $region1: #{tpu_custom_call.1} parent=0
    #allocation7 [shape = 'u8[2048]{0}', space=vmem, size = 0x800, scoped, tag = 'input window, operand 1, single buffered']
    #allocation8 [shape = 's32[1]{0}', space=sflag, size = 0x4, scoped, tag = 'scoped memory for tpu_custom_call.1']
    #allocation9 [shape = 's32[1]{0}', space=sflag, size = 0x4, scoped, tag = 'scoped memory for tpu_custom_call.1']
    #allocation10 [shape = 'u8[512]{0}', space=smem, size = 0x200, scoped, tag = 'output window, operand 0, single buffered']
    %9 = vsyncpa [#allocation8], 0
    %10 = vsyncpa [#allocation9], 0
    // Predicated region
    $region2: #{tpu_custom_call.1} parent=1 // pred_check
      _
    $region3: #{tpu_custom_call.1} parent=1 // pred_check_branch
      %12 = sbr.rel (0) target = $region5
    $region4: #{tpu_custom_call.1} parent=1 // pred_region
      %s14 = ssub.s32 64, 64
      %15 = vsyncadd [#allocation8], %s14
      %s17 = sshll.u32 [#allocation7], 4
      %s18 = int_to_ptr.vmem [resolvable:$true] %s17
      %20 = dma.hbm_to_vmem [thread:$0]  %s1, 64, %s18, [#allocation8]
    $region5: #{tpu_custom_call.1} parent=1 // pred_fallthru
      _
    // Predicated region
    $region6: #{tpu_custom_call.1} parent=1 // pred_check
      _
    $region7: #{tpu_custom_call.1} parent=1 // pred_check_branch
      %22 = sbr.rel (0) target = $region9
    $region8: #{tpu_custom_call.1} parent=1 // pred_region
      _
    $region9: #{tpu_custom_call.1} parent=1 // pred_fallthru
      _
    // Predicated region
    $region10: #{tpu_custom_call.1} parent=1 // pred_check
      _
    $region11: #{tpu_custom_call.1} parent=1 // pred_check_branch
      %24 = sbr.rel (0) target = $region13
    $region12: #{tpu_custom_call.1} parent=1 // pred_region
      %25 = dma.done [#allocation8], 64
    $region13: #{tpu_custom_call.1} parent=1 // pred_fallthru
      _
    %s26 = sld [smem:[#allocation6]]
    %p27 = scmp.eq.s32.totalorder 0, 0
    // Predicated region
    $region14: #{tpu_custom_call.1} parent=1 // pred_check
      %p28 = pneg %p27
    $region15: #{tpu_custom_call.1} parent=1 // pred_check_branch
      %30 = sbr.rel (%p28) target = $region17
    $region16: #{tpu_custom_call.1} parent=1 // pred_region
      %31 = vst [vmem:[#allocation2] sm:$0x7] 0.0
      %32 = vst [vmem:[#allocation3] sm:$0x7] 0.0
      %33 = vst [vmem:[#allocation4] sm:$0x7] 0.0
    $region17: #{tpu_custom_call.1} parent=1 // pred_fallthru
      _
    %v34 = vld [vmem:[#allocation7] sm:$0x7]
    %v35 = vld [vmem:[%s2] sm:$0x1]
    %vm36 = vcmask 1042432
    %v37 = vsel %vm36, %v34, -inf
    %v38 = vrot.slane %v37, 4
    %v39 = vmax.f32 %v37, %v38
    %v40 = vrot.slane %v39, 2
    %v41 = vmax.f32 %v39, %v40
    %v42 = vrot.slane %v41, 1
    %v43 = vmax.f32 %v41, %v42
    %v44 = vsub.f32 %v34, %v43
    %v45 = vmul.f32 %v44, 1.442695
    %v46 = vpow.pop %v45
    %v47 = vsel %vm36, %v46, 0.0
    %v48 = vrot.slane %v47, 4
    %v49 = vadd.f32 %v47, %v48
    %v50 = vrot.slane %v49, 2
    %v51 = vadd.f32 %v49, %v50
    %v52 = vrot.slane %v51, 1
    %v53 = vadd.f32 %v51, %v52
    %v54 = vrcp.pop %v53
    %v55 = vmul.f32 %v53, %v54
    %v56 = vsub.f32 2.0, %v55
    %v57 = vmul.f32 %v54, %v56
    %v58 = vmul.f32 %v46, %v57
    %v59 = vlaneseq
    %v60 = vshrl.u32 %v59, 7
    %s61 = sadd.s32 0, 1
    %s62 = smul.u32 %s61, 128
    %p63 = scmp.gt.s32.totalorder %s62, %s26
    %p64 = scmp.le.s32.totalorder %s62, %s26
    // Predicated region
    $region18: #{tpu_custom_call.1} parent=1 // pred_check
      %p65 = pneg %p64
    $region19: #{tpu_custom_call.1} parent=1 // pred_check_branch
      %67 = sbr.rel (%p65) target = $region21
    $region20: #{tpu_custom_call.1} parent=1 // pred_region
      %v68 = vlaneseq
      %v69 = vshrl.u32 %v68, 7
      %v70 = vsub.s32 0, %v69
      %v71 = vrot.slane %v35, %v70
      %vm72 = vcmp.eq.s32.totalorder %v60, %v71
      %v73 = vsel %vm72, %v58, 0.0
      %v74 = vsel %vm72, 1.0, 0.0
      %v75 = vld [vmem:[#allocation2] sm:$0x7]
      %v76 = vadd.f32 %v75, %v73
      %77 = vst [vmem:[#allocation2] sm:$0x7] %v76
      %v78 = vld [vmem:[#allocation3] sm:$0x7]
      %v79 = vadd.f32 %v78, %v58
      %80 = vst [vmem:[#allocation3] sm:$0x7] %v79
      %v81 = vld [vmem:[#allocation4] sm:$0x7]
      %v82 = vadd.f32 %v81, %v74
      %83 = vst [vmem:[#allocation4] sm:$0x7] %v82
    $region21: #{tpu_custom_call.1} parent=1 // pred_fallthru
      _
    // Predicated region
    $region22: #{tpu_custom_call.1} parent=1 // pred_check
      %p84 = pneg %p63
    $region23: #{tpu_custom_call.1} parent=1 // pred_check_branch
      %86 = sbr.rel (%p84) target = $region25
    $region24: #{tpu_custom_call.1} parent=1 // pred_region
      %v87 = vlaneseq
      %v88 = vand.u32 %v87, 127
      %s89 = smul.u32 0, 128
      %v90 = vstv %s89
      %v91 = vadd.s32 %v88, %v90
      %v92 = vstv %s26
      %vm93 = vcmp.lt.s32.totalorder %v91, %v92
      %v94 = vsel %vm93, %v35, 4294967295
      %v95 = vsel %vm93, 1, 0
      %vm96 = vcmp.eq.s32.totalorder %v95, 1
      %v97 = vsel %vm96, %v58, 0.0
      %v98 = vlaneseq
      %v99 = vshrl.u32 %v98, 7
      %v100 = vsub.s32 0, %v99
      %v101 = vrot.slane %v94, %v100
      %vm102 = vcmp.eq.s32.totalorder %v60, %v101
      %v103 = vsel %vm102, %v58, 0.0
      %v104 = vsel %vm102, 1.0, 0.0
      %v105 = vld [vmem:[#allocation2] sm:$0x7]
      %v106 = vadd.f32 %v105, %v103
      %107 = vst [vmem:[#allocation2] sm:$0x7] %v106
      %v108 = vld [vmem:[#allocation3] sm:$0x7]
      %v109 = vadd.f32 %v108, %v97
      %110 = vst [vmem:[#allocation3] sm:$0x7] %v109
      %v111 = vld [vmem:[#allocation4] sm:$0x7]
      %v112 = vadd.f32 %v111, %v104
      %113 = vst [vmem:[#allocation4] sm:$0x7] %v112
    $region25: #{tpu_custom_call.1} parent=1 // pred_fallthru
      _
    // Predicated region
    $region26: #{tpu_custom_call.1} parent=1 // pred_check
      %p114 = pneg %p27
    $region27: #{tpu_custom_call.1} parent=1 // pred_check_branch
      %116 = sbr.rel (%p114) target = $region29
    $region28: #{tpu_custom_call.1} parent=1 // pred_region
      %v117 = vld [vmem:[#allocation2] sm:$0x7]
      %v118 = vsel %vm36, %v117, 0.0
      %119 = vadd.xlane.f32.xlu0 %v118
      %v120 = vpop.xlane.xlu0 %119
      %v121 = vld [vmem:[#allocation3] sm:$0x7]
      %v122 = vsel %vm36, %v121, 0.0
      %123 = vadd.xlane.f32.xlu0 %v122
      %v124 = vpop.xlane.xlu0 %123
      %v125 = vld [vmem:[#allocation4] sm:$0x7]
      %v126 = vsel %vm36, %v125, 0.0
      %127 = vadd.xlane.f32.xlu0 %v126
      %v128 = vpop.xlane.xlu0 %127
      %v129 = vsub.f32 %v124, %v120
      %v130 = vsub.f32 %v128, %v120
      %v131 = vadd.f32 %v120, %v129
      %v132 = vadd.f32 %v131, 1e-07
      %v133 = vrcp.pop %v132
      %v134 = vmul.f32 %v120, %v133
      %v135 = vadd.f32 %v120, %v130
      %v136 = vadd.f32 %v135, 1e-07
      %v137 = vrcp.pop %v136
      %v138 = vmul.f32 %v120, %v137
      %v139 = vmul.f32 %v134, %v138
      %v140 = vmul.f32 %v139, 2.0
      %v141 = vadd.f32 %v134, %v138
      %v142 = vadd.f32 %v141, 1e-07
      %v143 = vrcp.pop %v142
      %v144 = vmul.f32 %v140, %v143
      %v145 = vmax.f32 %v144, 1e-07
      %v146 = vmin.f32 %v145, 0.9999999
      %vm147 = vcmask 2048
      %v148 = vsel %vm147, %v146, 0.0
      %149 = vadd.xlane.f32.xlu0 %v148
      %v150 = vpop.xlane.xlu0 %149
      %v151 = vrot.slane %v150, 4
      %v152 = vadd.f32 %v150, %v151
      %v153 = vrot.slane %v152, 2
      %v154 = vadd.f32 %v152, %v153
      %v155 = vrot.slane %v154, 1
      %v156 = vadd.f32 %v154, %v155
      %s157 = vtos %v156
      %v158 = vrcp.pop 3.0
      %s159 = vtos %v158
      %s160 = smul.f32 %s157, %s159
      %s161 = ssub.f32 1.0, %s160
      %s162 = scalar_lea.smem [#allocation10], 0
      %163 = sst [smem:[%s162]] %s161
    $region29: #{tpu_custom_call.1} parent=1 // pred_fallthru
      _
    // Predicated region
    $region30: #{tpu_custom_call.1} parent=1 // pred_check
      _
    $region31: #{tpu_custom_call.1} parent=1 // pred_check_branch
      %165 = sbr.rel (0) target = $region33
    $region32: #{tpu_custom_call.1} parent=1 // pred_region
      %s167 = ssub.s32 16, 16
      %168 = vsyncadd [#allocation9], %s167
      %171 = dma.smem_to_hbm [#allocation10], 16, %s3, [#allocation9]
    $region33: #{tpu_custom_call.1} parent=1 // pred_fallthru
      _
    // Predicated region
    $region34: #{tpu_custom_call.1} parent=1 // pred_check
      _
    $region35: #{tpu_custom_call.1} parent=1 // pred_check_branch
      %173 = sbr.rel (0) target = $region37
    $region36: #{tpu_custom_call.1} parent=1 // pred_region
      %174 = dma.done [#allocation9], 16
    $region37: #{tpu_custom_call.1} parent=1 // pred_fallthru
      _
    %175 = sfence
    %176 = vsyncpa [#allocation8], 1
    %177 = vsyncpa [#allocation9], 1

</llo_original>
